<compile_context>
chip_gen: v6e
topology: v6e:2x2x1
jax: 0.10.0
libtpu: 0.0.40
codegen_flags: <defaults>
</compile_context>

<pallas_src>
import jax
import jax.numpy as jnp
from jax.experimental import pallas as pl
from jax.experimental.pallas import tpu as pltpu


def decoder_kernel(mix_ref, mask_ref, w_ref, out_ref):
    # mix_ref, mask_ref: (1, N, TK)   w_ref: (L, N)   out_ref: (1, hop, TK)
    x = mix_ref[0] * mask_ref[0]                               # [N, TK] masked mixture
    # basis_signals (Linear, no bias): y[l, k] = sum_n W[l, n] * x[n, k]
    # Canonical MXU orientation: LHS contracts its last dim, RHS its first dim,
    # so neither operand needs a layout transpose and the output is lane-dense.
    y = jax.lax.dot_general(
        w_ref[...], x,
        dimension_numbers=(((1,), (0,)), ((), ())),
        preferred_element_type=jnp.float32)                    # [L, TK]
    L, TK = y.shape
    hop = L // 2
    first = y[:hop, :]                                         # [hop, TK]
    second = y[hop:, :]                                        # [hop, TK]
    # In-tile overlap-add (frame_step = hop): chunk j = first[j] + second[j-1];
    # chunk 0 has no in-tile left term (added by the wrapper across tile seams).
    out_ref[0, :, :1] = first[:, :1].astype(out_ref.dtype)
    if TK > 1:
        out_ref[0, :, pl.ds(1, TK - 1)] = (
            first[:, 1:] + second[:, :TK - 1]).astype(out_ref.dtype)


def decoder_forward(mixture_w, est_mask, weight, *, tk=None):
    """mixture_w, est_mask: [M, N, K]; weight: [L, N] (nn.Linear(N, L).weight)."""
    M, N, K = mixture_w.shape
    L, N_w = weight.shape
    assert N_w == N
    assert L % 2 == 0, "overlap_and_add decomposition here assumes even L"
    hop = L // 2
    T = (K - 1) * hop + L                                      # == (K + 1) * hop

    # ---- choose the frame (K) tile -------------------------------------------
    if tk is None:
        tk = K if K <= 1024 else 1024                          # tune per chip (v5e: 512-1024)
    if tk >= K:
        TK = K                                                 # single tile: block == full dim
    else:
        assert tk % 128 == 0, "multi-tile frame blocks must be a multiple of 128 lanes"
        TK = tk
    num_kt = pl.cdiv(K, TK)
    K_pad = num_kt * TK

    if K_pad != K:                                             # zero frames contribute zero
        pad = ((0, 0), (0, 0), (0, K_pad - K))
        mix_p = jnp.pad(mixture_w, pad)
        mask_p = jnp.pad(est_mask, pad)
    else:
        mix_p, mask_p = mixture_w, est_mask

    out_dtype = mixture_w.dtype
    dsize = jnp.dtype(out_dtype).itemsize
    cost = pl.CostEstimate(
        flops=2 * M * K_pad * N * L + M * N * K_pad,
        transcendentals=0,
        bytes_accessed=(2 * M * N * K_pad + L * N + M * hop * K_pad) * dsize)

    out_main = pl.pallas_call(
        decoder_kernel,
        out_shape=jax.ShapeDtypeStruct((M, hop, K_pad), out_dtype),
        grid_spec=pltpu.PrefetchScalarGridSpec(
            num_scalar_prefetch=0,
            grid=(M, num_kt),
            in_specs=[
                pl.BlockSpec((1, N, TK), lambda m, t: (m, 0, t)),
                pl.BlockSpec((1, N, TK), lambda m, t: (m, 0, t)),
                pl.BlockSpec((L, N), lambda m, t: (0, 0)),     # weight resident
            ],
            out_specs=pl.BlockSpec((1, hop, TK), lambda m, t: (m, 0, t)),
        ),
        compiler_params=pltpu.CompilerParams(
            dimension_semantics=("parallel", "parallel")),
        cost_estimate=cost,
    )(mix_p, mask_p, weight)                                   # [M, hop, K_pad]

    # ---- tile-seam / final-chunk contributions (tiny, plain JAX) -------------
    # Second half of each tile's last frame belongs to the next tile's first
    # chunk (or to the appended final chunk K).  Only num_kt frames.
    last = jnp.arange(TK - 1, K_pad, TK)                       # [num_kt]
    xt = mix_p[:, :, last] * mask_p[:, :, last]                # [M, N, num_kt]
    tails = jnp.einsum("ln,mnt->mlt", weight[hop:, :], xt)     # [M, hop, num_kt]

    chunks = jnp.concatenate(
        [out_main, jnp.zeros((M, hop, 1), out_dtype)], axis=2)  # [M, hop, K_pad+1]
    chunks = chunks.at[:, :, TK::TK].add(tails.astype(out_dtype))
    chunks = chunks[:, :, :K + 1]                               # [M, hop, K+1]

    # Output is ~1% of the input bytes; transpose/reshape here is nearly free.
    return jnp.transpose(chunks, (0, 2, 1)).reshape(M, T)


def decoder_ref(mixture_w, est_mask, weight):
    """Pure-JAX reference matching the PyTorch Decoder.forward (generic O&A)."""
    M, N, K = mixture_w.shape
    L = weight.shape[0]
    hop = L // 2
    T = (K - 1) * hop + L
    x = mixture_w * est_mask                                   # [M, N, K]
    y = jnp.einsum("mnk,ln->mkl", x, weight)                   # [M, K, L]
    idx = jnp.arange(K)[:, None] * hop + jnp.arange(L)[None, :]  # [K, L]
    out = jnp.zeros((M, T), y.dtype)
    return out.at[:, idx.reshape(-1)].add(y.reshape(M, K * L))


if __name__ == "__main__":
    key = jax.random.PRNGKey(0)
    configs = [
        # (M, N, K, L, tk)
        (2, 16, 256, 16, 128),   # two frame tiles, K an exact multiple of TK
        (2, 16, 200, 16, 128),   # two frame tiles, K padded up to 256
        (2, 16, 40, 8, None),    # single tile, odd K, smaller filter
    ]
    for (M, N, K, L, tk) in configs:
        k1, k2, k3, key = jax.random.split(key, 4)
        mixture_w = jax.random.normal(k1, (M, N, K), dtype=jnp.float32)
        est_mask = jax.nn.sigmoid(jax.random.normal(k2, (M, N, K), dtype=jnp.float32))
        # Deterministic init of basis_signals weight [L, N] (nn.Linear(N, L, bias=False)).
        weight = jax.random.normal(k3, (L, N), dtype=jnp.float32) / jnp.sqrt(N)

        out = decoder_forward(mixture_w, est_mask, weight, tk=tk)
        jax.block_until_ready(out)

        ref = decoder_ref(mixture_w, est_mask, weight)
        assert out.shape == (M, (K - 1) * (L // 2) + L), out.shape
        err = float(jnp.max(jnp.abs(out - ref)))
        assert jnp.allclose(out, ref, atol=1e-4, rtol=1e-4), err

    print("KERNEL_OK")
</pallas_src>

<mosaic_0001>
module attributes {stable_mosaic.version = 11 : i64} {
  func.func @decoder_kernel(%arg0: i32, %arg1: i32, %arg2: memref<1x16x128xf32, #tpu.memory_space<vmem>>, %arg3: memref<1x16x128xf32, #tpu.memory_space<vmem>>, %arg4: memref<16x16xf32, #tpu.memory_space<vmem>>, %arg5: memref<1x8x128xf32, #tpu.memory_space<vmem>>) attributes {dimension_semantics = [#tpu.dimension_semantics<parallel>, #tpu.dimension_semantics<parallel>], iteration_bounds = array<i64: 2, 2>, scalar_prefetch = 0 : i64, scratch_operands = 0 : i64, tpu.core_type = #tpu.core_type<tc>, window_params = [{transform_indices = @transform_0, window_bounds = array<i64: 1, 16, 128>}, {transform_indices = @transform_1, window_bounds = array<i64: 1, 16, 128>}, {pipeline_mode = #tpu.pipeline_mode<synchronous>, transform_indices = @transform_2, window_bounds = array<i64: 16, 16>}, {transform_indices = @transform_3, window_bounds = array<i64: 1, 8, 128>}]} {
    %c0 = arith.constant 0 : index
    %c0_0 = arith.constant 0 : index
    %c0_1 = arith.constant 0 : index
    %0 = vector.load %arg2[%c0, %c0_0, %c0_1] : memref<1x16x128xf32, #tpu.memory_space<vmem>>, vector<1x16x128xf32>
    %1 = vector.shape_cast %0 : vector<1x16x128xf32> to vector<16x128xf32>
    %c0_2 = arith.constant 0 : index
    %c0_3 = arith.constant 0 : index
    %c0_4 = arith.constant 0 : index
    %2 = vector.load %arg3[%c0_2, %c0_3, %c0_4] : memref<1x16x128xf32, #tpu.memory_space<vmem>>, vector<1x16x128xf32>
    %3 = vector.shape_cast %2 : vector<1x16x128xf32> to vector<16x128xf32>
    %4 = arith.mulf %1, %3 : vector<16x128xf32>
    %c0_5 = arith.constant 0 : index
    %c0_6 = arith.constant 0 : index
    %5 = vector.load %arg4[%c0_5, %c0_6] : memref<16x16xf32, #tpu.memory_space<vmem>>, vector<16x16xf32>
    %cst = arith.constant dense<0.000000e+00> : vector<16x128xf32>
    %6 = tpu.matmul %5, %4, %cst {dimension_numbers = #tpu.dot_dimension_numbers<[1], [0], [0], [1], [0, 0, 1, 1], [], []>} : vector<16x16xf32>, vector<16x128xf32>, vector<16x128xf32> -> vector<16x128xf32>
    %7 = vector.extract_strided_slice %6 {offsets = [0, 0], sizes = [8, 128], strides = [1, 1]} : vector<16x128xf32> to vector<8x128xf32>
    %8 = vector.extract_strided_slice %6 {offsets = [8, 0], sizes = [8, 128], strides = [1, 1]} : vector<16x128xf32> to vector<8x128xf32>
    %9 = vector.extract_strided_slice %7 {offsets = [0, 0], sizes = [8, 1], strides = [1, 1]} : vector<8x128xf32> to vector<8x1xf32>
    %c0_7 = arith.constant 0 : index
    %c0_8 = arith.constant 0 : index
    %c0_9 = arith.constant 0 : index
    %10 = vector.load %arg5[%c0_7, %c0_8, %c0_9] : memref<1x8x128xf32, #tpu.memory_space<vmem>>, vector<1x8x1xf32>
    %11 = vector.shape_cast %10 : vector<1x8x1xf32> to vector<8x1xf32>
    %12 = vector.shape_cast %9 : vector<8x1xf32> to vector<1x8x1xf32>
    tpu.vector_store %arg5[%c0_7, %c0_8, %c0_9], %12 {strides = array<i32>} : memref<1x8x128xf32, #tpu.memory_space<vmem>>, vector<1x8x1xf32>,
    %13 = vector.extract_strided_slice %7 {offsets = [0, 1], sizes = [8, 127], strides = [1, 1]} : vector<8x128xf32> to vector<8x127xf32>
    %14 = vector.extract_strided_slice %8 {offsets = [0, 0], sizes = [8, 127], strides = [1, 1]} : vector<8x128xf32> to vector<8x127xf32>
    %15 = arith.addf %13, %14 : vector<8x127xf32>
    %c0_10 = arith.constant 0 : index
    %c0_11 = arith.constant 0 : index
    %c1 = arith.constant 1 : index
    %16 = vector.load %arg5[%c0_10, %c0_11, %c1] : memref<1x8x128xf32, #tpu.memory_space<vmem>>, vector<1x8x127xf32>
    %17 = vector.shape_cast %16 : vector<1x8x127xf32> to vector<8x127xf32>
    %18 = vector.shape_cast %15 : vector<8x127xf32> to vector<1x8x127xf32>
    tpu.vector_store %arg5[%c0_10, %c0_11, %c1], %18 {strides = array<i32>} : memref<1x8x128xf32, #tpu.memory_space<vmem>>, vector<1x8x127xf32>,
    return
  }
  func.func @transform_0(%arg0: i32, %arg1: i32) -> (i32, i32, i32) {
    %c0_i32 = arith.constant 0 : i32
    %c0_i32_0 = arith.constant 0 : i32
    return %arg0, %c0_i32, %arg1 : i32, i32, i32
  }
  func.func @transform_1(%arg0: i32, %arg1: i32) -> (i32, i32, i32) {
    %c0_i32 = arith.constant 0 : i32
    %c0_i32_0 = arith.constant 0 : i32
    return %arg0, %c0_i32, %arg1 : i32, i32, i32
  }
  func.func @transform_2(%arg0: i32, %arg1: i32) -> (i32, i32) {
    %c0_i32 = arith.constant 0 : i32
    %c0_i32_0 = arith.constant 0 : i32
    %c0_i32_1 = arith.constant 0 : i32
    return %c0_i32, %c0_i32_0 : i32, i32
  }
  func.func @transform_3(%arg0: i32, %arg1: i32) -> (i32, i32, i32) {
    %c0_i32 = arith.constant 0 : i32
    %c0_i32_0 = arith.constant 0 : i32
    return %arg0, %c0_i32, %arg1 : i32, i32, i32
  }
}

</mosaic_0001>

<llo_original>
// kernel: tpu_custom_call.1
$region0: #{tpu_custom_call.1}
  #allocation0 [shape = 'u32[]', space=smem, size = 0x4, offset = 0x4, fixed_abs, tag = 'smem constant byte address 0x4 - core index']
  #allocation1 [shape = 'u32[144,128]{1,0:T(1,128)}', space=vmem, size = 0x12000, scoped, tag = 'internal scratch']
  %s0 = inlined_call_operand.hbm [shape: f32[2,16,256], index: 0, kind: input, shape index: {}]
  %s1 = inlined_call_operand.hbm [shape: f32[2,16,256], index: 1, kind: input, shape index: {}]
  %s2 = inlined_call_operand.hbm [shape: f32[16,16], index: 2, kind: input, shape index: {}]
  %s3 = inlined_call_operand.hbm [shape: f32[2,8,256], index: 3, kind: output, shape index: {}]
  %s4 = sld [smem:[#allocation0]]
  $region57: #{tpu_custom_call.1} parent=0
    _
  %s6 = ssub.s32 1, %s4
  %s7 = scalar_select 0, %s6, %s4
  $region1: #{tpu_custom_call.1} parent=0
    #allocation2 [shape = 'u8[16384]{0}', space=vmem, size = 0x4000, scoped, tag = 'input window, operand 0']
    #allocation3 [shape = 's32[2]{0}', space=sflag, size = 0x8, scoped, tag = 'scoped memory for tpu_custom_call.1']
    #allocation4 [shape = 's32[2]{0}', space=sflag, size = 0x8, scoped, tag = 'scoped memory for tpu_custom_call.1']
    #allocation5 [shape = 'u8[16384]{0}', space=vmem, size = 0x4000, scoped, tag = 'input window, operand 1']
    #allocation6 [shape = 's32[2]{0}', space=sflag, size = 0x8, scoped, tag = 'scoped memory for tpu_custom_call.1']
    #allocation7 [shape = 'u8[8192]{0}', space=vmem, size = 0x2000, scoped, tag = 'input window, operand 2, single buffered']
    #allocation8 [shape = 'u8[8192]{0}', space=vmem, size = 0x2000, scoped, tag = 'output window, operand 0']
    %8 = vsyncpa [#allocation3], 0
    %s9 = scalar_lea.sflag [#allocation3], 1
    %10 = vsyncpa %s9, 0
    %11 = vsyncpa [#allocation6], 0
    %s12 = scalar_lea.sflag [#allocation6], 1
    %13 = vsyncpa %s12, 0
    %14 = vsyncpa [#allocation4], 0
    %s15 = scalar_lea.sflag [#allocation4], 1
    %16 = vsyncpa %s15, 0
    loop: start=0, step=1, limit=6
    $region2: #{tpu_custom_call.1} parent=1 // loop_pre_header
      _
    $region3: #{tpu_custom_call.1} parent=1 // loop_header
      %s18 = sphi 0, %s22
      %p19 = scmp.ge.s32.totalorder %s18, 6
      %s25 = sphi 0, %s37
      %s26 = sphi 0, %s33
      %s27 = sphi 0, %s25
      %s28 = sphi 0, %s26
      %s29 = sphi 0, %s27
      %s30 = sphi 0, %s28
      %s42 = sphi 0, %s44
      %s45 = sphi 0, %s42
      %s46 = sphi 0, %s45
      %s62 = sphi 0, %s46
      %s70 = sphi 0, %s72
      %s73 = sphi 0, %s70
      %s74 = sphi 0, %s73
      %s90 = sphi 0, %s74
      %s94 = sphi 0, %s94
      %s96 = sphi 0, %s94
      %s97 = sphi 0, %s96
      %s111 = sphi 0, %s97
      %s119 = sphi 0, %s121
      %s122 = sphi 0, %s119
      %s123 = sphi 0, %s122
      %s139 = sphi 0, %s123
    $region4: #{tpu_custom_call.1} parent=1 // loop_header_branch
      %21 = sbr.rel (%p19) target = $region8
    $region5: #{tpu_custom_call.1} parent=1 // loop_body
      %s23 = ssub.s32 %s18, 1
      %s24 = ssub.s32 %s18, 2
      %s31 = sadd.s32 1, %s26
      %p32 = scmp.ge.s32.totalorder %s31, 2
      %s33 = scalar_select %p32, 0, %s31
      %s34 = sadd.s32 1, %s25
      %s35 = scalar_select %p32, %s34, %s25
      %p36 = scmp.ge.s32.totalorder %s35, 2
      %s37 = scalar_select %p36, 0, %s35
      %s38 = ssub.s32 %s25, %s37
      %s39 = ssub.s32 %s26, %s33
      %s40 = sor.u32 %s38, %s39
      %p41 = scmp.eq.s32.totalorder %s40, 0
      %s43 = sadd.s32 %s42, 1
      %s44 = scalar_select %p41, %s42, %s43
      %p47 = pneg %p41
      %p48 = scmp.eq.s32.totalorder %s18, 3
      %p49 = por %p47, %p48
      %p50 = scmp.ne.s32.totalorder %s42, %s45
      %p51 = scmp.eq.s32.totalorder %s18, 0
      %p52 = por %p50, %p51
      %p53 = scmp.ne.s32.totalorder %s42, %s45
      %p54 = scmp.eq.s32.totalorder %s23, 3
      %p55 = por %p53, %p54
      %p56 = scmp.ne.s32.totalorder %s45, %s46
      %p57 = scmp.eq.s32.totalorder %s23, 0
      %p58 = por %p56, %p57
      %p59 = scmp.ne.s32.totalorder %s45, %s46
      %p60 = scmp.eq.s32.totalorder %s24, 3
      %p61 = por %p59, %p60
      %p63 = scmp.ne.s32.totalorder %s46, %s62
      %p64 = scmp.eq.s32.totalorder %s24, 0
      %p65 = por %p63, %p64
      %s66 = ssub.s32 %s25, %s37
      %s67 = ssub.s32 %s26, %s33
      %s68 = sor.u32 %s66, %s67
      %p69 = scmp.eq.s32.totalorder %s68, 0
      %s71 = sadd.s32 %s70, 1
      %s72 = scalar_select %p69, %s70, %s71
      %p75 = pneg %p69
      %p76 = scmp.eq.s32.totalorder %s18, 3
      %p77 = por %p75, %p76
      %p78 = scmp.ne.s32.totalorder %s70, %s73
      %p79 = scmp.eq.s32.totalorder %s18, 0
      %p80 = por %p78, %p79
      %p81 = scmp.ne.s32.totalorder %s70, %s73
      %p82 = scmp.eq.s32.totalorder %s23, 3
      %p83 = por %p81, %p82
      %p84 = scmp.ne.s32.totalorder %s73, %s74
      %p85 = scmp.eq.s32.totalorder %s23, 0
      %p86 = por %p84, %p85
      %p87 = scmp.ne.s32.totalorder %s73, %s74
      %p88 = scmp.eq.s32.totalorder %s24, 3
      %p89 = por %p87, %p88
      %p91 = scmp.ne.s32.totalorder %s74, %s90
      %p92 = scmp.eq.s32.totalorder %s24, 0
      %p93 = por %p91, %p92
      %s95 = sadd.s32 %s94, 1
      %p98 = scmp.eq.s32.totalorder %s18, 3
      %p99 = scmp.ne.s32.totalorder %s94, %s96
      %p100 = scmp.eq.s32.totalorder %s18, 0
      %p101 = por %p99, %p100
      %p102 = scmp.ne.s32.totalorder %s94, %s96
      %p103 = scmp.eq.s32.totalorder %s23, 3
      %p104 = por %p102, %p103
      %p105 = scmp.ne.s32.totalorder %s96, %s97
      %p106 = scmp.eq.s32.totalorder %s23, 0
      %p107 = por %p105, %p106
      %p108 = scmp.ne.s32.totalorder %s96, %s97
      %p109 = scmp.eq.s32.totalorder %s24, 3
      %p110 = por %p108, %p109
      %p112 = scmp.ne.s32.totalorder %s97, %s111
      %p113 = scmp.eq.s32.totalorder %s24, 0
      %p114 = por %p112, %p113
      %s115 = ssub.s32 %s25, %s37
      %s116 = ssub.s32 %s26, %s33
      %s117 = sor.u32 %s115, %s116
      %p118 = scmp.eq.s32.totalorder %s117, 0
      %s120 = sadd.s32 %s119, 1
      %s121 = scalar_select %p118, %s119, %s120
      %p124 = pneg %p118
      %p125 = scmp.eq.s32.totalorder %s18, 3
      %p126 = por %p124, %p125
      %p127 = scmp.ne.s32.totalorder %s119, %s122
      %p128 = scmp.eq.s32.totalorder %s18, 0
      %p129 = por %p127, %p128
      %p130 = scmp.ne.s32.totalorder %s119, %s122
      %p131 = scmp.eq.s32.totalorder %s23, 3
      %p132 = por %p130, %p131
      %p133 = scmp.ne.s32.totalorder %s122, %s123
      %p134 = scmp.eq.s32.totalorder %s23, 0
      %p135 = por %p133, %p134
      %p136 = scmp.ne.s32.totalorder %s122, %s123
      %p137 = scmp.eq.s32.totalorder %s24, 3
      %p138 = por %p136, %p137
      %p140 = scmp.ne.s32.totalorder %s123, %s139
      %p141 = scmp.eq.s32.totalorder %s24, 0
      %p142 = por %p140, %p141
      %p143 = scmp.le.s32.totalorder 1, %s18
      %p144 = scmp.lt.s32.totalorder %s18, 5
      %p145 = pnand %p143, %p144
      %p146 = pneg %p145
      // Predicated region
      $region9: #{tpu_custom_call.1} parent=5 // pred_check
        _
      $region10: #{tpu_custom_call.1} parent=5 // pred_check_branch
        %148 = sbr.rel (%p145) target = $region12
      $region11: #{tpu_custom_call.1} parent=5 // pred_region
        %s149 = ssub.s32 %s18, 1
        // Predicated region
        $region13: #{tpu_custom_call.1} parent=11 // pred_check
          %p150 = pneg %p107
        $region14: #{tpu_custom_call.1} parent=11 // pred_check_branch
          %152 = sbr.rel (%p150) target = $region16
        $region15: #{tpu_custom_call.1} parent=11 // pred_region
          %s154 = ssub.s32 256, 256
          %155 = vsyncadd [#allocation6], %s154
          %s156 = sshll.u32 [#allocation7], 4
          %s157 = int_to_ptr.vmem [resolvable:$true] %s156
          %162 = dma.hbm_to_vmem [thread:$0]  %s2, 256, %s157, [#allocation6], 128, 128, 8
        $region16: #{tpu_custom_call.1} parent=11 // pred_fallthru
          _
      $region12: #{tpu_custom_call.1} parent=5 // pred_fallthru
        _
      %p163 = scmp.lt.s32.totalorder %s18, 4
      // Predicated region
      $region17: #{tpu_custom_call.1} parent=5 // pred_check
        %p164 = pneg %p163
      $region18: #{tpu_custom_call.1} parent=5 // pred_check_branch
        %166 = sbr.rel (%p164) target = $region20
      $region19: #{tpu_custom_call.1} parent=5 // pred_region
        // Predicated region
        $region21: #{tpu_custom_call.1} parent=19 // pred_check
          %p167 = pneg %p52
        $region22: #{tpu_custom_call.1} parent=19 // pred_check_branch
          %169 = sbr.rel (%p167) target = $region24
        $region23: #{tpu_custom_call.1} parent=19 // pred_region
          %s170 = sand.u32 %s42, 1
          %s171 = scalar_lea.sflag [#allocation3], %s170
          %s172 = sand.u32 %s42, 1
          %s173 = smul.addr %s172, 16
          %s174 = scalar_lea.vmem [#allocation2], %s173
          %s176 = ssub.s32 256, 256
          %177 = vsyncadd %s171, %s176
          %s178 = smul.addr %s25, 4
          %s179 = sadd.s32 %s26, %s178
          %s180 = smul.addr %s179, 128
          %s181 = scalar_lea.hbm %s0, %s180
          %s182 = sshll.u32 %s174, 4
          %s183 = int_to_ptr.vmem [resolvable:$true] %s182
          %188 = dma.hbm_to_vmem [thread:$0]  %s181, 256, %s183, %s171, 256, 128, 8
        $region24: #{tpu_custom_call.1} parent=19 // pred_fallthru
          _
        // Predicated region
        $region25: #{tpu_custom_call.1} parent=19 // pred_check
          %p189 = pneg %p80
        $region26: #{tpu_custom_call.1} parent=19 // pred_check_branch
          %191 = sbr.rel (%p189) target = $region28
        $region27: #{tpu_custom_call.1} parent=19 // pred_region
          %s192 = sand.u32 %s18, 1
          %s193 = scalar_lea.sflag [#allocation6], %s192
          %s194 = sand.u32 %s70, 1
          %s195 = smul.addr %s194, 16
          %s196 = scalar_lea.vmem [#allocation5], %s195
          %s198 = ssub.s32 256, 256
          %199 = vsyncadd %s193, %s198
          %s200 = smul.addr %s25, 4
          %s201 = sadd.s32 %s26, %s200
          %s202 = smul.addr %s201, 128
          %s203 = scalar_lea.hbm %s1, %s202
          %s204 = sshll.u32 %s196, 4
          %s205 = int_to_ptr.vmem [resolvable:$true] %s204
          %210 = dma.hbm_to_vmem [thread:$0]  %s203, 256, %s205, %s193, 256, 128, 8
        $region28: #{tpu_custom_call.1} parent=19 // pred_fallthru
          _
      $region20: #{tpu_custom_call.1} parent=5 // pred_fallthru
        _
      %p211 = scmp.le.s32.totalorder 1, %s18
      %p212 = scmp.lt.s32.totalorder %s18, 5
      %p213 = pnand %p211, %p212
      %p214 = pneg %p213
      // Predicated region
      $region29: #{tpu_custom_call.1} parent=5 // pred_check
        _
      $region30: #{tpu_custom_call.1} parent=5 // pred_check_branch
        %216 = sbr.rel (%p213) target = $region32
      $region31: #{tpu_custom_call.1} parent=5 // pred_region
        %s217 = ssub.s32 %s18, 1
        %s218 = sand.u32 %s45, 1
        %s219 = scalar_lea.sflag [#allocation3], %s218
        %s220 = sand.u32 %s45, 1
        %s221 = smul.addr %s220, 16
        %s222 = scalar_lea.vmem [#allocation2], %s221
        // Predicated region
        $region33: #{tpu_custom_call.1} parent=31 // pred_check
          %p223 = pneg %p58
        $region34: #{tpu_custom_call.1} parent=31 // pred_check_branch
          %225 = sbr.rel (%p223) target = $region36
        $region35: #{tpu_custom_call.1} parent=31 // pred_region
          %226 = dma.done %s219, 256
        $region36: #{tpu_custom_call.1} parent=31 // pred_fallthru
          _
        %s227 = sand.u32 %s23, 1
        %s228 = scalar_lea.sflag [#allocation6], %s227
        %s229 = sand.u32 %s73, 1
        %s230 = smul.addr %s229, 16
        %s231 = scalar_lea.vmem [#allocation5], %s230
        // Predicated region
        $region37: #{tpu_custom_call.1} parent=31 // pred_check
          %p232 = pneg %p86
        $region38: #{tpu_custom_call.1} parent=31 // pred_check_branch
          %234 = sbr.rel (%p232) target = $region40
        $region39: #{tpu_custom_call.1} parent=31 // pred_region
          %235 = dma.done %s228, 256
        $region40: #{tpu_custom_call.1} parent=31 // pred_fallthru
          _
        // Predicated region
        $region41: #{tpu_custom_call.1} parent=31 // pred_check
          %p236 = pneg %p107
        $region42: #{tpu_custom_call.1} parent=31 // pred_check_branch
          %238 = sbr.rel (%p236) target = $region44
        $region43: #{tpu_custom_call.1} parent=31 // pred_region
          %239 = dma.done [#allocation6], 256
        $region44: #{tpu_custom_call.1} parent=31 // pred_fallthru
          _
        %s240 = sand.u32 %s45, 1
        %s241 = scalar_lea.sflag [#allocation3], %s240
        %s242 = sand.u32 %s45, 1
        %s243 = smul.addr %s242, 16
        %s244 = scalar_lea.vmem [#allocation2], %s243
        %p245 = pneg %p58
        %p246 = pneg %p55
        %s247 = sand.u32 %s23, 1
        %s248 = scalar_lea.sflag [#allocation6], %s247
        %s249 = sand.u32 %s73, 1
        %s250 = smul.addr %s249, 16
        %s251 = scalar_lea.vmem [#allocation5], %s250
        %p252 = pneg %p86
        %p253 = pneg %p83
        %p254 = pneg %p107
        %p255 = pneg %p104
        %p256 = pneg %p135
        %p257 = pneg %p132
        %s258 = sand.u32 %s122, 1
        %s259 = scalar_lea.sflag [#allocation4], %s258
        %s260 = sand.u32 %s122, 1
        %s261 = smul.addr %s260, 8
        %s262 = scalar_lea.vmem [#allocation8], %s261
        %v263 = vld [vmem:[%s222] sm:$0xff]
        %v264 = vld [vmem:[%s222 + $0x8] sm:$0xff]
        %v265 = vld [vmem:[%s231] sm:$0xff]
        %v266 = vld [vmem:[%s231 + $0x8] sm:$0xff]
        %v267 = vmul.f32 %v263, %v265
        %v268 = vmul.f32 %v264, %v266
        %v269 = vld [vmem:[#allocation7] sm:$0xff]
        %v270 = vld [vmem:[#allocation7 + $0x8] sm:$0xff]
        %vm271 = vcmask 130048
        %v273 = vsel %vm271, %v269, 0
        %v276 = vsel %vm271, %v270, 0
        %278 = vmatprep.subr.mxu0 0.0
        %279 = vmatpush1.msra.mxu0 0.0
        %280 = vmatprep.subr.mxu0 0.0
        %281 = vmatpush1.msra.mxu0 0.0
        %282 = vmatprep.subr.mxu0 0.0
        %283 = vmatpush1.msra.mxu0 0.0
        %284 = vmatprep.subr.mxu0 0.0
        %285 = vmatpush1.msra.mxu0 0.0
        %286 = vmatprep.subr.mxu0 0.0
        %287 = vmatpush1.msra.mxu0 0.0
        %288 = vmatprep.subr.mxu0 0.0
        %289 = vmatpush1.msra.mxu0 0.0
        %290 = vmatprep.subr.mxu0 0.0
        %291 = vmatpush1.msra.mxu0 0.0
        %292 = vmatprep.subr.mxu0 0.0
        %293 = vmatpush1.msra.mxu0 0.0
        %294 = vmatprep.subr.mxu0 0.0
        %295 = vmatpush1.msra.mxu0 0.0
        %296 = vmatprep.subr.mxu0 0.0
        %297 = vmatpush1.msra.mxu0 0.0
        %298 = vmatprep.subr.mxu0 0.0
        %299 = vmatpush1.msra.mxu0 0.0
        %300 = vmatprep.subr.mxu0 0.0
        %301 = vmatpush1.msra.mxu0 0.0
        %302 = vmatprep.subr.mxu0 0.0
        %303 = vmatpush1.msra.mxu0 0.0
        %304 = vmatprep.subr.mxu0 0.0
        %305 = vmatpush1.msra.mxu0 0.0
        %306 = vmatprep.subr.mxu0 0.0
        %307 = vmatpush1.msra.mxu0 %v268
        %308 = vmatprep.subr.mxu0 0.0
        %309 = vmatpush1.msra.mxu0 %v267
        %310 = vmatprep.subr.mxu0 0.0
        %311 = vmatpush2.msra.mxu0 0.0
        %312 = vmatprep.subr.mxu0 0.0
        %313 = vmatpush2.msra.mxu0 0.0
        %314 = vmatprep.subr.mxu0 0.0
        %315 = vmatpush2.msra.mxu0 0.0
        %316 = vmatprep.subr.mxu0 0.0
        %317 = vmatpush2.msra.mxu0 0.0
        %318 = vmatprep.subr.mxu0 0.0
        %319 = vmatpush2.msra.mxu0 0.0
        %320 = vmatprep.subr.mxu0 0.0
        %321 = vmatpush2.msra.mxu0 0.0
        %322 = vmatprep.subr.mxu0 0.0
        %323 = vmatpush2.msra.mxu0 0.0
        %324 = vmatprep.subr.mxu0 0.0
        %325 = vmatpush2.msra.mxu0 0.0
        %326 = vmatprep.subr.mxu0 0.0
        %327 = vmatpush2.msra.mxu0 0.0
        %328 = vmatprep.subr.mxu0 0.0
        %329 = vmatpush2.msra.mxu0 0.0
        %330 = vmatprep.subr.mxu0 0.0
        %331 = vmatpush2.msra.mxu0 0.0
        %332 = vmatprep.subr.mxu0 0.0
        %333 = vmatpush2.msra.mxu0 0.0
        %334 = vmatprep.subr.mxu0 0.0
        %335 = vmatpush2.msra.mxu0 0.0
        %336 = vmatprep.subr.mxu0 0.0
        %337 = vmatpush2.msra.mxu0 0.0
        %338 = vmatprep.subr.mxu0 0.0
        %339 = vmatpush2.msra.mxu0 0.0
        %340 = vmatprep.subr.mxu0 0.0
        %341 = vmatpush2.msra.mxu0 0.0
        %342 = vmatprep.mubr.f32.mxu0 0.0
        %343 = vmatmul.mubr.f32.gmra.mxu0 %v273
        %v344 = vpop.f32.mrf.mxu0
        %v345 = vadd.f32 0.0, %v344
        %v346 = vpop.f32.mrf.mxu0
        %347 = vmatprep.mubr.f32.mxu0 0.0
        %348 = vmatmul.mubr.f32.gmra.mxu0 %v276
        %v349 = vpop.f32.mrf.mxu0
        %v350 = vadd.f32 0.0, %v349
        %v351 = vpop.f32.mrf.mxu0
        %352 = vdwg.mxu0
        %vm353 = vcmask 7168
        %354 = vst.msk [vmem:[%s262] sm:$0xff] %vm353, %v345
        %356 = vrot.lane.b32.xlu0 %v350, 1
        %v357 = vpop.permute.xlu0 %356
        %v359 = vadd.f32 %v345, %v357
        %vm360 = vcmask 1047560
        %361 = vst.msk [vmem:[%s262] sm:$0xff] %vm360, %v359
        %s362 = sand.u32 %s122, 1
        %s363 = scalar_lea.sflag [#allocation4], %s362
        %s364 = sand.u32 %s122, 1
        %s365 = smul.addr %s364, 8
        %s366 = scalar_lea.vmem [#allocation8], %s365
        // Predicated region
        $region45: #{tpu_custom_call.1} parent=31 // pred_check
          %p367 = pneg %p132
        $region46: #{tpu_custom_call.1} parent=31 // pred_check_branch
          %369 = sbr.rel (%p367) target = $region48
        $region47: #{tpu_custom_call.1} parent=31 // pred_region
          %s371 = ssub.s32 128, 128
          %372 = vsyncadd %s363, %s371
          %s373 = smul.addr %s27, 2
          %s374 = sadd.s32 %s28, %s373
          %s375 = smul.addr %s374, 128
          %s376 = scalar_lea.hbm %s3, %s375
          %s378 = sshll.u32 %s366, 4
          %s379 = int_to_ptr.vmem [resolvable:$true] %s378
          %381 = dma.vmem_to_hbm [thread:$0]  %s379, 128, %s376, %s363
        $region48: #{tpu_custom_call.1} parent=31 // pred_fallthru
          _
      $region32: #{tpu_custom_call.1} parent=5 // pred_fallthru
        _
      %p382 = scmp.le.s32.totalorder 2, %s18
      // Predicated region
      $region49: #{tpu_custom_call.1} parent=5 // pred_check
        %p383 = pneg %p382
      $region50: #{tpu_custom_call.1} parent=5 // pred_check_branch
        %385 = sbr.rel (%p383) target = $region52
      $region51: #{tpu_custom_call.1} parent=5 // pred_region
        %s386 = ssub.s32 %s18, 2
        // Predicated region
        $region53: #{tpu_custom_call.1} parent=51 // pred_check
          %p387 = pneg %p138
        $region54: #{tpu_custom_call.1} parent=51 // pred_check_branch
          %389 = sbr.rel (%p387) target = $region56
        $region55: #{tpu_custom_call.1} parent=51 // pred_region
          %s390 = sand.u32 %s123, 1
          %s391 = scalar_lea.sflag [#allocation4], %s390
          %s392 = sand.u32 %s123, 1
          %s393 = smul.addr %s392, 8
          %s394 = scalar_lea.vmem [#allocation8], %s393
          %395 = dma.done %s391, 128
        $region56: #{tpu_custom_call.1} parent=51 // pred_fallthru
          _
      $region52: #{tpu_custom_call.1} parent=5 // pred_fallthru
        _
    $region6: #{tpu_custom_call.1} parent=1 // loop_footer
      %s22 = sadd.s32 1, %s18
    $region7: #{tpu_custom_call.1} parent=1 // loop_footer_branch
      %17 = sbr.rel target = $region3
    $region8: #{tpu_custom_call.1} parent=1 // loop_exit
      _
    %396 = vsyncpa [#allocation3], 1
    %s397 = scalar_lea.sflag [#allocation3], 1
    %398 = vsyncpa %s397, 1
    %399 = vsyncpa [#allocation6], 1
    %s400 = scalar_lea.sflag [#allocation6], 1
    %401 = vsyncpa %s400, 1
    %402 = vsyncpa [#allocation4], 1
    %s403 = scalar_lea.sflag [#allocation4], 1
    %404 = vsyncpa %s403, 1

</llo_original>
